<compile_context>
chip_gen: v6e
topology: v6e:2x2x1
jax: 0.10.0
libtpu: 0.0.40
codegen_flags: <defaults>
</compile_context>

<pallas_src>
import jax
import jax.numpy as jnp
from jax import lax
from jax.experimental import pallas as pl
from jax.experimental.pallas import tpu as pltpu


def lstm_kernel(x_ref, wih_ref, whh_ref, b_ref, wfc_ref, bfc_ref, out_ref, gx_ref):
    # x_ref:  (Bt, T, Din)   batch-first input block
    # wih_ref:(Din, 4H)      input->gates weight (transposed), f32
    # whh_ref:(4H, 4H)       hidden->gates weight, transposed and zero-padded on
    #                        rows [H:4H], bf16
    # b_ref:  (1, 4H)        b_ih + b_hh, f32
    # wfc_ref:(4H, O)        final linear weight, transposed, zero-padded rows [H:4H]
    # bfc_ref:(1, O)         final linear bias
    # out_ref:(Bt, O)        predictions
    # gx_ref: (Bt, T, 4H)    scratch: precomputed input projections
    Bt, T, Din = x_ref.shape
    G4 = whh_ref.shape[1]
    H = G4 // 4

    # ---- Input projection for all timesteps: x_t @ W_ih^T + b ----------------
    if Din == 1:
        # A (Bt*T,1)x(1,4H) matmul is >99% MXU padding; do it on the VPU instead.
        gx = x_ref[...] * wih_ref[...].reshape(1, 1, G4)
    else:
        gx = jnp.dot(
            x_ref[...].reshape(Bt * T, Din),
            wih_ref[...],
            preferred_element_type=jnp.float32,
        ).reshape(Bt, T, G4)
    gx_ref[...] = gx + b_ref[...].reshape(1, 1, G4)

    whh = whh_ref[...]  # (4H, 4H) bf16, zero rows for the padded [H:4H] inputs

    use_roll = (G4 % 128 == 0)
    if use_roll:
        lane = lax.broadcasted_iota(jnp.int32, (Bt, G4), 1)
        g_mask = (lane >= 2 * H) & (lane < 3 * H)
    else:
        zpad = jnp.zeros((Bt, 3 * H), jnp.float32)

    # Wide state: real h/c live in lanes [0:H]; lanes [H:4H] carry bounded junk
    # that never reaches the output because the padded weight rows are zero.
    h = jnp.zeros((Bt, G4), jnp.float32)
    c = jnp.zeros((Bt, G4), jnp.float32)

    # ---- Recurrence, fully unrolled (T small & static) -----------------------
    for t in range(T):
        gates = gx_ref[:, t, :] + jnp.dot(
            h.astype(jnp.bfloat16), whh, preferred_element_type=jnp.float32
        )  # (Bt, 4H), PyTorch gate order [i, f, g, o]

        if use_roll:
            # Whole-vreg activations; align gates with XLU rolls (no lane slicing).
            act = jnp.where(g_mask, jnp.tanh(gates), jax.nn.sigmoid(gates))
            f_al = pltpu.roll(act, shift=3 * H, axis=1)  # lanes[0:H] <- f
            g_al = pltpu.roll(act, shift=2 * H, axis=1)  # lanes[0:H] <- g
            o_al = pltpu.roll(act, shift=1 * H, axis=1)  # lanes[0:H] <- o
            c = f_al * c + act * g_al                    # act lanes[0:H] == i
            h = o_al * jnp.tanh(c)
        else:
            # Fallback (4H not lane-aligned): plain gate slicing.
            i_g = jax.nn.sigmoid(gates[:, 0:H])
            f_g = jax.nn.sigmoid(gates[:, H:2 * H])
            g_g = jnp.tanh(gates[:, 2 * H:3 * H])
            o_g = jax.nn.sigmoid(gates[:, 3 * H:4 * H])
            c_h = f_g * c[:, 0:H] + i_g * g_g
            h_h = o_g * jnp.tanh(c_h)
            c = jnp.concatenate([c_h, zpad], axis=1)
            h = jnp.concatenate([h_h, zpad], axis=1)

    # ---- fc on the last hidden state (padded rows of W_fc are zero) ----------
    out_ref[...] = (
        jnp.dot(h, wfc_ref[...], preferred_element_type=jnp.float32) + bfc_ref[...]
    )


@jax.jit
def lstm_model_forward(x, w_ih_t, w_hh_pad_bf16, b, w_fc_pad_t, b_fc):
    """x: (B, T, Din) batch-first float32.  Returns (B, O) float32."""
    B, T, Din = x.shape
    G4 = w_hh_pad_bf16.shape[1]
    H = G4 // 4
    O = w_fc_pad_t.shape[1]

    # Batch-parallel grid (lets v7x split independent sequences across its 2 TCs).
    B_TILE = B if B <= 8 else 8
    assert B % B_TILE == 0, "pad batch to a multiple of 8 for B > 8"
    grid = (B // B_TILE,)

    flops = 2 * B * T * G4 * (G4 + Din) + 2 * B * G4 * O
    transcendentals = B * T * (2 * G4 + H)
    bytes_accessed = (
        x.size * 4 + w_ih_t.size * 4 + w_hh_pad_bf16.size * 2
        + b.size * 4 + w_fc_pad_t.size * 4 + b_fc.size * 4 + B * O * 4
    )

    return pl.pallas_call(
        lstm_kernel,
        out_shape=jax.ShapeDtypeStruct((B, O), jnp.float32),
        grid_spec=pltpu.PrefetchScalarGridSpec(
            num_scalar_prefetch=0,
            grid=grid,
            in_specs=[
                pl.BlockSpec((B_TILE, T, Din), lambda bb: (bb, 0, 0)),
                pl.BlockSpec((Din, G4), lambda bb: (0, 0)),
                pl.BlockSpec((G4, G4), lambda bb: (0, 0)),
                pl.BlockSpec((1, G4), lambda bb: (0, 0)),
                pl.BlockSpec((G4, O), lambda bb: (0, 0)),
                pl.BlockSpec((1, O), lambda bb: (0, 0)),
            ],
            out_specs=pl.BlockSpec((B_TILE, O), lambda bb: (bb, 0)),
            scratch_shapes=[pltpu.VMEM((B_TILE, T, G4), jnp.float32)],
        ),
        compiler_params=pltpu.CompilerParams(
            dimension_semantics=("parallel",),
            vmem_limit_bytes=32 * 1024 * 1024,
        ),
        cost_estimate=pl.CostEstimate(
            flops=flops,
            transcendentals=transcendentals,
            bytes_accessed=bytes_accessed,
        ),
    )(x, w_ih_t, w_hh_pad_bf16, b, w_fc_pad_t, b_fc)


def make_params(key, input_size, hidden_size, output_size):
    """PyTorch-style uniform(-1/sqrt(H), 1/sqrt(H)) init + kernel-friendly layouts."""
    H, G4 = hidden_size, 4 * hidden_size
    k = 1.0 / jnp.sqrt(jnp.float32(H))
    keys = jax.random.split(key, 6)
    u = lambda kk, shape: jax.random.uniform(kk, shape, jnp.float32, -k, k)
    w_ih = u(keys[0], (G4, input_size))    # PyTorch weight_ih_l0
    w_hh = u(keys[1], (G4, H))             # PyTorch weight_hh_l0
    b_ih = u(keys[2], (G4,))
    b_hh = u(keys[3], (G4,))
    w_fc = u(keys[4], (output_size, H))    # PyTorch Linear weight
    b_fc = u(keys[5], (output_size,))

    # Kernel layouts: transposed, hidden axis zero-padded from H to 4H so the
    # wide (B, 4H) state's junk lanes never contribute, W_hh in bf16 for the MXU.
    w_hh_pad = jnp.zeros((G4, G4), jnp.float32).at[:H, :].set(w_hh.T)
    w_fc_pad_t = jnp.zeros((G4, output_size), jnp.float32).at[:H, :].set(w_fc.T)
    return dict(
        # kernel params
        w_ih_t=w_ih.T,                           # (Din, 4H) f32
        w_hh_pad_bf16=w_hh_pad.astype(jnp.bfloat16),  # (4H, 4H) bf16
        b=(b_ih + b_hh)[None, :],                # (1, 4H) f32
        w_fc_pad_t=w_fc_pad_t,                   # (4H, O) f32
        b_fc=b_fc[None, :],                      # (1, O)  f32
        # reference (full-precision, PyTorch-layout-transposed) params
        w_hh_t=w_hh.T,                           # (H, 4H) f32
        w_fc_t=w_fc.T,                           # (H, O)  f32
    )


def reference_forward(x, p):
    """Pure-JAX f32 reference replicating PyTorch nn.LSTM + Linear forward."""
    B, T, Din = x.shape
    H = p["w_hh_t"].shape[0]

    def step(carry, x_t):
        h, c = carry
        gates = x_t @ p["w_ih_t"] + h @ p["w_hh_t"] + p["b"][0]
        i_g = jax.nn.sigmoid(gates[:, 0:H])
        f_g = jax.nn.sigmoid(gates[:, H:2 * H])
        g_g = jnp.tanh(gates[:, 2 * H:3 * H])
        o_g = jax.nn.sigmoid(gates[:, 3 * H:4 * H])
        c_new = f_g * c + i_g * g_g
        h_new = o_g * jnp.tanh(c_new)
        return (h_new, c_new), None

    (h_last, _), _ = lax.scan(
        step,
        (jnp.zeros((B, H), jnp.float32), jnp.zeros((B, H), jnp.float32)),
        jnp.transpose(x, (1, 0, 2)),
    )
    return h_last @ p["w_fc_t"] + p["b_fc"]


if __name__ == "__main__":
    # Small shapes consistent with the module: univariate series, hidden=32.
    B, T, INPUT_SIZE, HIDDEN_SIZE, OUTPUT_SIZE = 2, 8, 1, 32, 1

    key = jax.random.PRNGKey(0)
    kx, kp = jax.random.split(key)
    x = jax.random.normal(kx, (B, T, INPUT_SIZE), jnp.float32)
    params = make_params(kp, INPUT_SIZE, HIDDEN_SIZE, OUTPUT_SIZE)

    out = lstm_model_forward(
        x,
        params["w_ih_t"],
        params["w_hh_pad_bf16"],
        params["b"],
        params["w_fc_pad_t"],
        params["b_fc"],
    )
    out = jax.block_until_ready(out)

    ref = reference_forward(x, params)
    assert out.shape == (B, OUTPUT_SIZE), out.shape
    # bf16 recurrent weights -> loosened tolerance vs. the f32 reference.
    assert jnp.allclose(out, ref, atol=2e-2, rtol=2e-2), (out, ref)

    print("KERNEL_OK")
</pallas_src>

<mosaic_0001>
module attributes {stable_mosaic.version = 11 : i64} {
  func.func @lstm_kernel(%arg0: i32, %arg1: memref<2x8x1xf32, #tpu.memory_space<vmem>>, %arg2: memref<1x128xf32, #tpu.memory_space<vmem>>, %arg3: memref<128x128xbf16, #tpu.memory_space<vmem>>, %arg4: memref<1x128xf32, #tpu.memory_space<vmem>>, %arg5: memref<128x1xf32, #tpu.memory_space<vmem>>, %arg6: memref<1x1xf32, #tpu.memory_space<vmem>>, %arg7: memref<2x1xf32, #tpu.memory_space<vmem>>, %arg8: memref<2x8x128xf32, #tpu.memory_space<vmem>>) attributes {dimension_semantics = [#tpu.dimension_semantics<parallel>], iteration_bounds = array<i64: 1>, scalar_prefetch = 0 : i64, scratch_operands = 1 : i64, tpu.core_type = #tpu.core_type<tc>, window_params = [{transform_indices = @transform_0, window_bounds = array<i64: 2, 8, 1>}, {pipeline_mode = #tpu.pipeline_mode<synchronous>, transform_indices = @transform_1, window_bounds = array<i64: 1, 128>}, {pipeline_mode = #tpu.pipeline_mode<synchronous>, transform_indices = @transform_2, window_bounds = array<i64: 128, 128>}, {pipeline_mode = #tpu.pipeline_mode<synchronous>, transform_indices = @transform_3, window_bounds = array<i64: 1, 128>}, {pipeline_mode = #tpu.pipeline_mode<synchronous>, transform_indices = @transform_4, window_bounds = array<i64: 128, 1>}, {pipeline_mode = #tpu.pipeline_mode<synchronous>, transform_indices = @transform_5, window_bounds = array<i64: 1, 1>}, {transform_indices = @transform_6, window_bounds = array<i64: 2, 1>}]} {
    %c0 = arith.constant 0 : index
    %c0_0 = arith.constant 0 : index
    %c0_1 = arith.constant 0 : index
    %0 = vector.load %arg1[%c0, %c0_0, %c0_1] : memref<2x8x1xf32, #tpu.memory_space<vmem>>, vector<2x8x1xf32>
    %c0_2 = arith.constant 0 : index
    %c0_3 = arith.constant 0 : index
    %1 = vector.load %arg2[%c0_2, %c0_3] : memref<1x128xf32, #tpu.memory_space<vmem>>, vector<1x128xf32>
    %2 = vector.shape_cast %1 : vector<1x128xf32> to vector<1x1x128xf32>
    %3 = vector.broadcast %0 : vector<2x8x1xf32> to vector<2x8x128xf32>
    %4 = vector.broadcast %2 : vector<1x1x128xf32> to vector<2x8x128xf32>
    %5 = arith.mulf %3, %4 : vector<2x8x128xf32>
    %c0_4 = arith.constant 0 : index
    %c0_5 = arith.constant 0 : index
    %6 = vector.load %arg4[%c0_4, %c0_5] : memref<1x128xf32, #tpu.memory_space<vmem>>, vector<1x128xf32>
    %7 = vector.shape_cast %6 : vector<1x128xf32> to vector<1x1x128xf32>
    %8 = vector.broadcast %7 : vector<1x1x128xf32> to vector<2x8x128xf32>
    %9 = arith.addf %5, %8 : vector<2x8x128xf32>
    %c0_6 = arith.constant 0 : index
    %c0_7 = arith.constant 0 : index
    %c0_8 = arith.constant 0 : index
    %10 = vector.load %arg8[%c0_6, %c0_7, %c0_8] : memref<2x8x128xf32, #tpu.memory_space<vmem>>, vector<2x8x128xf32>
    tpu.vector_store %arg8[%c0_6, %c0_7, %c0_8], %9 {strides = array<i32>} : memref<2x8x128xf32, #tpu.memory_space<vmem>>, vector<2x8x128xf32>,
    %c0_9 = arith.constant 0 : index
    %c0_10 = arith.constant 0 : index
    %11 = vector.load %arg3[%c0_9, %c0_10] : memref<128x128xbf16, #tpu.memory_space<vmem>>, vector<128x128xbf16>
    %12 = tpu.iota {dimensions = array<i32: 1>} : vector<2x128xi32>
    %c64_i32 = arith.constant 64 : i32
    %13 = vector.broadcast %c64_i32 : i32 to vector<2x128xi32>
    %14 = arith.cmpi sge, %12, %13 : vector<2x128xi32>
    %c96_i32 = arith.constant 96 : i32
    %15 = vector.broadcast %c96_i32 : i32 to vector<2x128xi32>
    %16 = arith.cmpi slt, %12, %15 : vector<2x128xi32>
    %17 = arith.andi %14, %16 : vector<2x128xi1>
    %cst = arith.constant 0.000000e+00 : f32
    %18 = vector.broadcast %cst : f32 to vector<2x128xf32>
    %cst_11 = arith.constant 0.000000e+00 : f32
    %19 = vector.broadcast %cst_11 : f32 to vector<2x128xf32>
    %c0_12 = arith.constant 0 : index
    %c0_13 = arith.constant 0 : index
    %c0_14 = arith.constant 0 : index
    %20 = vector.load %arg8[%c0_12, %c0_13, %c0_14] : memref<2x8x128xf32, #tpu.memory_space<vmem>>, vector<2x1x128xf32>
    %21 = vector.shape_cast %20 : vector<2x1x128xf32> to vector<2x128xf32>
    %22 = arith.truncf %18 : vector<2x128xf32> to vector<2x128xbf16>
    %cst_15 = arith.constant dense<0.000000e+00> : vector<2x128xf32>
    %23 = tpu.matmul %22, %11, %cst_15 {dimension_numbers = #tpu.dot_dimension_numbers<[1], [0], [0], [1], [0, 0, 1, 1], [], []>} : vector<2x128xbf16>, vector<128x128xbf16>, vector<2x128xf32> -> vector<2x128xf32>
    %24 = arith.addf %21, %23 : vector<2x128xf32>
    %25 = math.tanh %24 : vector<2x128xf32>
    %26 = arith.negf %24 : vector<2x128xf32>
    %27 = math.exp %26 : vector<2x128xf32>
    %cst_16 = arith.constant 1.000000e+00 : f32
    %28 = vector.broadcast %cst_16 : f32 to vector<2x128xf32>
    %29 = arith.addf %28, %27 : vector<2x128xf32>
    %30 = arith.divf %28, %29 : vector<2x128xf32>
    %31 = arith.select %17, %25, %30 : vector<2x128xi1>, vector<2x128xf32>
    %c96_i32_17 = arith.constant 96 : i32
    %32 = tpu.dynamic_rotate %31 by %c96_i32_17 dim 1 : vector<2x128xf32>, i32 -> vector<2x128xf32>
    %c64_i32_18 = arith.constant 64 : i32
    %33 = tpu.dynamic_rotate %31 by %c64_i32_18 dim 1 : vector<2x128xf32>, i32 -> vector<2x128xf32>
    %c32_i32 = arith.constant 32 : i32
    %34 = tpu.dynamic_rotate %31 by %c32_i32 dim 1 : vector<2x128xf32>, i32 -> vector<2x128xf32>
    %35 = arith.mulf %32, %19 : vector<2x128xf32>
    %36 = arith.mulf %31, %33 : vector<2x128xf32>
    %37 = arith.addf %35, %36 : vector<2x128xf32>
    %38 = math.tanh %37 : vector<2x128xf32>
    %39 = arith.mulf %34, %38 : vector<2x128xf32>
    %c0_19 = arith.constant 0 : index
    %c1 = arith.constant 1 : index
    %c0_20 = arith.constant 0 : index
    %40 = vector.load %arg8[%c0_19, %c1, %c0_20] : memref<2x8x128xf32, #tpu.memory_space<vmem>>, vector<2x1x128xf32>
    %41 = vector.shape_cast %40 : vector<2x1x128xf32> to vector<2x128xf32>
    %42 = arith.truncf %39 : vector<2x128xf32> to vector<2x128xbf16>
    %cst_21 = arith.constant dense<0.000000e+00> : vector<2x128xf32>
    %43 = tpu.matmul %42, %11, %cst_21 {dimension_numbers = #tpu.dot_dimension_numbers<[1], [0], [0], [1], [0, 0, 1, 1], [], []>} : vector<2x128xbf16>, vector<128x128xbf16>, vector<2x128xf32> -> vector<2x128xf32>
    %44 = arith.addf %41, %43 : vector<2x128xf32>
    %45 = math.tanh %44 : vector<2x128xf32>
    %46 = arith.negf %44 : vector<2x128xf32>
    %47 = math.exp %46 : vector<2x128xf32>
    %cst_22 = arith.constant 1.000000e+00 : f32
    %48 = vector.broadcast %cst_22 : f32 to vector<2x128xf32>
    %49 = arith.addf %48, %47 : vector<2x128xf32>
    %50 = arith.divf %48, %49 : vector<2x128xf32>
    %51 = arith.select %17, %45, %50 : vector<2x128xi1>, vector<2x128xf32>
    %c96_i32_23 = arith.constant 96 : i32
    %52 = tpu.dynamic_rotate %51 by %c96_i32_23 dim 1 : vector<2x128xf32>, i32 -> vector<2x128xf32>
    %c64_i32_24 = arith.constant 64 : i32
    %53 = tpu.dynamic_rotate %51 by %c64_i32_24 dim 1 : vector<2x128xf32>, i32 -> vector<2x128xf32>
    %c32_i32_25 = arith.constant 32 : i32
    %54 = tpu.dynamic_rotate %51 by %c32_i32_25 dim 1 : vector<2x128xf32>, i32 -> vector<2x128xf32>
    %55 = arith.mulf %52, %37 : vector<2x128xf32>
    %56 = arith.mulf %51, %53 : vector<2x128xf32>
    %57 = arith.addf %55, %56 : vector<2x128xf32>
    %58 = math.tanh %57 : vector<2x128xf32>
    %59 = arith.mulf %54, %58 : vector<2x128xf32>
    %c0_26 = arith.constant 0 : index
    %c2 = arith.constant 2 : index
    %c0_27 = arith.constant 0 : index
    %60 = vector.load %arg8[%c0_26, %c2, %c0_27] : memref<2x8x128xf32, #tpu.memory_space<vmem>>, vector<2x1x128xf32>
    %61 = vector.shape_cast %60 : vector<2x1x128xf32> to vector<2x128xf32>
    %62 = arith.truncf %59 : vector<2x128xf32> to vector<2x128xbf16>
    %cst_28 = arith.constant dense<0.000000e+00> : vector<2x128xf32>
    %63 = tpu.matmul %62, %11, %cst_28 {dimension_numbers = #tpu.dot_dimension_numbers<[1], [0], [0], [1], [0, 0, 1, 1], [], []>} : vector<2x128xbf16>, vector<128x128xbf16>, vector<2x128xf32> -> vector<2x128xf32>
    %64 = arith.addf %61, %63 : vector<2x128xf32>
    %65 = math.tanh %64 : vector<2x128xf32>
    %66 = arith.negf %64 : vector<2x128xf32>
    %67 = math.exp %66 : vector<2x128xf32>
    %cst_29 = arith.constant 1.000000e+00 : f32
    %68 = vector.broadcast %cst_29 : f32 to vector<2x128xf32>
    %69 = arith.addf %68, %67 : vector<2x128xf32>
    %70 = arith.divf %68, %69 : vector<2x128xf32>
    %71 = arith.select %17, %65, %70 : vector<2x128xi1>, vector<2x128xf32>
    %c96_i32_30 = arith.constant 96 : i32
    %72 = tpu.dynamic_rotate %71 by %c96_i32_30 dim 1 : vector<2x128xf32>, i32 -> vector<2x128xf32>
    %c64_i32_31 = arith.constant 64 : i32
    %73 = tpu.dynamic_rotate %71 by %c64_i32_31 dim 1 : vector<2x128xf32>, i32 -> vector<2x128xf32>
    %c32_i32_32 = arith.constant 32 : i32
    %74 = tpu.dynamic_rotate %71 by %c32_i32_32 dim 1 : vector<2x128xf32>, i32 -> vector<2x128xf32>
    %75 = arith.mulf %72, %57 : vector<2x128xf32>
    %76 = arith.mulf %71, %73 : vector<2x128xf32>
    %77 = arith.addf %75, %76 : vector<2x128xf32>
    %78 = math.tanh %77 : vector<2x128xf32>
    %79 = arith.mulf %74, %78 : vector<2x128xf32>
    %c0_33 = arith.constant 0 : index
    %c3 = arith.constant 3 : index
    %c0_34 = arith.constant 0 : index
    %80 = vector.load %arg8[%c0_33, %c3, %c0_34] : memref<2x8x128xf32, #tpu.memory_space<vmem>>, vector<2x1x128xf32>
    %81 = vector.shape_cast %80 : vector<2x1x128xf32> to vector<2x128xf32>
    %82 = arith.truncf %79 : vector<2x128xf32> to vector<2x128xbf16>
    %cst_35 = arith.constant dense<0.000000e+00> : vector<2x128xf32>
    %83 = tpu.matmul %82, %11, %cst_35 {dimension_numbers = #tpu.dot_dimension_numbers<[1], [0], [0], [1], [0, 0, 1, 1], [], []>} : vector<2x128xbf16>, vector<128x128xbf16>, vector<2x128xf32> -> vector<2x128xf32>
    %84 = arith.addf %81, %83 : vector<2x128xf32>
    %85 = math.tanh %84 : vector<2x128xf32>
    %86 = arith.negf %84 : vector<2x128xf32>
    %87 = math.exp %86 : vector<2x128xf32>
    %cst_36 = arith.constant 1.000000e+00 : f32
    %88 = vector.broadcast %cst_36 : f32 to vector<2x128xf32>
    %89 = arith.addf %88, %87 : vector<2x128xf32>
    %90 = arith.divf %88, %89 : vector<2x128xf32>
    %91 = arith.select %17, %85, %90 : vector<2x128xi1>, vector<2x128xf32>
    %c96_i32_37 = arith.constant 96 : i32
    %92 = tpu.dynamic_rotate %91 by %c96_i32_37 dim 1 : vector<2x128xf32>, i32 -> vector<2x128xf32>
    %c64_i32_38 = arith.constant 64 : i32
    %93 = tpu.dynamic_rotate %91 by %c64_i32_38 dim 1 : vector<2x128xf32>, i32 -> vector<2x128xf32>
    %c32_i32_39 = arith.constant 32 : i32
    %94 = tpu.dynamic_rotate %91 by %c32_i32_39 dim 1 : vector<2x128xf32>, i32 -> vector<2x128xf32>
    %95 = arith.mulf %92, %77 : vector<2x128xf32>
    %96 = arith.mulf %91, %93 : vector<2x128xf32>
    %97 = arith.addf %95, %96 : vector<2x128xf32>
    %98 = math.tanh %97 : vector<2x128xf32>
    %99 = arith.mulf %94, %98 : vector<2x128xf32>
    %c0_40 = arith.constant 0 : index
    %c4 = arith.constant 4 : index
    %c0_41 = arith.constant 0 : index
    %100 = vector.load %arg8[%c0_40, %c4, %c0_41] : memref<2x8x128xf32, #tpu.memory_space<vmem>>, vector<2x1x128xf32>
    %101 = vector.shape_cast %100 : vector<2x1x128xf32> to vector<2x128xf32>
    %102 = arith.truncf %99 : vector<2x128xf32> to vector<2x128xbf16>
    %cst_42 = arith.constant dense<0.000000e+00> : vector<2x128xf32>
    %103 = tpu.matmul %102, %11, %cst_42 {dimension_numbers = #tpu.dot_dimension_numbers<[1], [0], [0], [1], [0, 0, 1, 1], [], []>} : vector<2x128xbf16>, vector<128x128xbf16>, vector<2x128xf32> -> vector<2x128xf32>
    %104 = arith.addf %101, %103 : vector<2x128xf32>
    %105 = math.tanh %104 : vector<2x128xf32>
    %106 = arith.negf %104 : vector<2x128xf32>
    %107 = math.exp %106 : vector<2x128xf32>
    %cst_43 = arith.constant 1.000000e+00 : f32
    %108 = vector.broadcast %cst_43 : f32 to vector<2x128xf32>
    %109 = arith.addf %108, %107 : vector<2x128xf32>
    %110 = arith.divf %108, %109 : vector<2x128xf32>
    %111 = arith.select %17, %105, %110 : vector<2x128xi1>, vector<2x128xf32>
    %c96_i32_44 = arith.constant 96 : i32
    %112 = tpu.dynamic_rotate %111 by %c96_i32_44 dim 1 : vector<2x128xf32>, i32 -> vector<2x128xf32>
    %c64_i32_45 = arith.constant 64 : i32
    %113 = tpu.dynamic_rotate %111 by %c64_i32_45 dim 1 : vector<2x128xf32>, i32 -> vector<2x128xf32>
    %c32_i32_46 = arith.constant 32 : i32
    %114 = tpu.dynamic_rotate %111 by %c32_i32_46 dim 1 : vector<2x128xf32>, i32 -> vector<2x128xf32>
    %115 = arith.mulf %112, %97 : vector<2x128xf32>
    %116 = arith.mulf %111, %113 : vector<2x128xf32>
    %117 = arith.addf %115, %116 : vector<2x128xf32>
    %118 = math.tanh %117 : vector<2x128xf32>
    %119 = arith.mulf %114, %118 : vector<2x128xf32>
    %c0_47 = arith.constant 0 : index
    %c5 = arith.constant 5 : index
    %c0_48 = arith.constant 0 : index
    %120 = vector.load %arg8[%c0_47, %c5, %c0_48] : memref<2x8x128xf32, #tpu.memory_space<vmem>>, vector<2x1x128xf32>
    %121 = vector.shape_cast %120 : vector<2x1x128xf32> to vector<2x128xf32>
    %122 = arith.truncf %119 : vector<2x128xf32> to vector<2x128xbf16>
    %cst_49 = arith.constant dense<0.000000e+00> : vector<2x128xf32>
    %123 = tpu.matmul %122, %11, %cst_49 {dimension_numbers = #tpu.dot_dimension_numbers<[1], [0], [0], [1], [0, 0, 1, 1], [], []>} : vector<2x128xbf16>, vector<128x128xbf16>, vector<2x128xf32> -> vector<2x128xf32>
    %124 = arith.addf %121, %123 : vector<2x128xf32>
    %125 = math.tanh %124 : vector<2x128xf32>
    %126 = arith.negf %124 : vector<2x128xf32>
    %127 = math.exp %126 : vector<2x128xf32>
    %cst_50 = arith.constant 1.000000e+00 : f32
    %128 = vector.broadcast %cst_50 : f32 to vector<2x128xf32>
    %129 = arith.addf %128, %127 : vector<2x128xf32>
    %130 = arith.divf %128, %129 : vector<2x128xf32>
    %131 = arith.select %17, %125, %130 : vector<2x128xi1>, vector<2x128xf32>
    %c96_i32_51 = arith.constant 96 : i32
    %132 = tpu.dynamic_rotate %131 by %c96_i32_51 dim 1 : vector<2x128xf32>, i32 -> vector<2x128xf32>
    %c64_i32_52 = arith.constant 64 : i32
    %133 = tpu.dynamic_rotate %131 by %c64_i32_52 dim 1 : vector<2x128xf32>, i32 -> vector<2x128xf32>
    %c32_i32_53 = arith.constant 32 : i32
    %134 = tpu.dynamic_rotate %131 by %c32_i32_53 dim 1 : vector<2x128xf32>, i32 -> vector<2x128xf32>
    %135 = arith.mulf %132, %117 : vector<2x128xf32>
    %136 = arith.mulf %131, %133 : vector<2x128xf32>
    %137 = arith.addf %135, %136 : vector<2x128xf32>
    %138 = math.tanh %137 : vector<2x128xf32>
    %139 = arith.mulf %134, %138 : vector<2x128xf32>
    %c0_54 = arith.constant 0 : index
    %c6 = arith.constant 6 : index
    %c0_55 = arith.constant 0 : index
    %140 = vector.load %arg8[%c0_54, %c6, %c0_55] : memref<2x8x128xf32, #tpu.memory_space<vmem>>, vector<2x1x128xf32>
    %141 = vector.shape_cast %140 : vector<2x1x128xf32> to vector<2x128xf32>
    %142 = arith.truncf %139 : vector<2x128xf32> to vector<2x128xbf16>
    %cst_56 = arith.constant dense<0.000000e+00> : vector<2x128xf32>
    %143 = tpu.matmul %142, %11, %cst_56 {dimension_numbers = #tpu.dot_dimension_numbers<[1], [0], [0], [1], [0, 0, 1, 1], [], []>} : vector<2x128xbf16>, vector<128x128xbf16>, vector<2x128xf32> -> vector<2x128xf32>
    %144 = arith.addf %141, %143 : vector<2x128xf32>
    %145 = math.tanh %144 : vector<2x128xf32>
    %146 = arith.negf %144 : vector<2x128xf32>
    %147 = math.exp %146 : vector<2x128xf32>
    %cst_57 = arith.constant 1.000000e+00 : f32
    %148 = vector.broadcast %cst_57 : f32 to vector<2x128xf32>
    %149 = arith.addf %148, %147 : vector<2x128xf32>
    %150 = arith.divf %148, %149 : vector<2x128xf32>
    %151 = arith.select %17, %145, %150 : vector<2x128xi1>, vector<2x128xf32>
    %c96_i32_58 = arith.constant 96 : i32
    %152 = tpu.dynamic_rotate %151 by %c96_i32_58 dim 1 : vector<2x128xf32>, i32 -> vector<2x128xf32>
    %c64_i32_59 = arith.constant 64 : i32
    %153 = tpu.dynamic_rotate %151 by %c64_i32_59 dim 1 : vector<2x128xf32>, i32 -> vector<2x128xf32>
    %c32_i32_60 = arith.constant 32 : i32
    %154 = tpu.dynamic_rotate %151 by %c32_i32_60 dim 1 : vector<2x128xf32>, i32 -> vector<2x128xf32>
    %155 = arith.mulf %152, %137 : vector<2x128xf32>
    %156 = arith.mulf %151, %153 : vector<2x128xf32>
    %157 = arith.addf %155, %156 : vector<2x128xf32>
    %158 = math.tanh %157 : vector<2x128xf32>
    %159 = arith.mulf %154, %158 : vector<2x128xf32>
    %c0_61 = arith.constant 0 : index
    %c7 = arith.constant 7 : index
    %c0_62 = arith.constant 0 : index
    %160 = vector.load %arg8[%c0_61, %c7, %c0_62] : memref<2x8x128xf32, #tpu.memory_space<vmem>>, vector<2x1x128xf32>
    %161 = vector.shape_cast %160 : vector<2x1x128xf32> to vector<2x128xf32>
    %162 = arith.truncf %159 : vector<2x128xf32> to vector<2x128xbf16>
    %cst_63 = arith.constant dense<0.000000e+00> : vector<2x128xf32>
    %163 = tpu.matmul %162, %11, %cst_63 {dimension_numbers = #tpu.dot_dimension_numbers<[1], [0], [0], [1], [0, 0, 1, 1], [], []>} : vector<2x128xbf16>, vector<128x128xbf16>, vector<2x128xf32> -> vector<2x128xf32>
    %164 = arith.addf %161, %163 : vector<2x128xf32>
    %165 = math.tanh %164 : vector<2x128xf32>
    %166 = arith.negf %164 : vector<2x128xf32>
    %167 = math.exp %166 : vector<2x128xf32>
    %cst_64 = arith.constant 1.000000e+00 : f32
    %168 = vector.broadcast %cst_64 : f32 to vector<2x128xf32>
    %169 = arith.addf %168, %167 : vector<2x128xf32>
    %170 = arith.divf %168, %169 : vector<2x128xf32>
    %171 = arith.select %17, %165, %170 : vector<2x128xi1>, vector<2x128xf32>
    %c96_i32_65 = arith.constant 96 : i32
    %172 = tpu.dynamic_rotate %171 by %c96_i32_65 dim 1 : vector<2x128xf32>, i32 -> vector<2x128xf32>
    %c64_i32_66 = arith.constant 64 : i32
    %173 = tpu.dynamic_rotate %171 by %c64_i32_66 dim 1 : vector<2x128xf32>, i32 -> vector<2x128xf32>
    %c32_i32_67 = arith.constant 32 : i32
    %174 = tpu.dynamic_rotate %171 by %c32_i32_67 dim 1 : vector<2x128xf32>, i32 -> vector<2x128xf32>
    %175 = arith.mulf %172, %157 : vector<2x128xf32>
    %176 = arith.mulf %171, %173 : vector<2x128xf32>
    %177 = arith.addf %175, %176 : vector<2x128xf32>
    %178 = math.tanh %177 : vector<2x128xf32>
    %179 = arith.mulf %174, %178 : vector<2x128xf32>
    %c0_68 = arith.constant 0 : index
    %c0_69 = arith.constant 0 : index
    %180 = vector.load %arg5[%c0_68, %c0_69] : memref<128x1xf32, #tpu.memory_space<vmem>>, vector<128x1xf32>
    %cst_70 = arith.constant dense<0.000000e+00> : vector<2x1xf32>
    %181 = tpu.matmul %179, %180, %cst_70 {dimension_numbers = #tpu.dot_dimension_numbers<[1], [0], [0], [1], [0, 0, 1, 1], [], []>} : vector<2x128xf32>, vector<128x1xf32>, vector<2x1xf32> -> vector<2x1xf32>
    %c0_71 = arith.constant 0 : index
    %c0_72 = arith.constant 0 : index
    %182 = vector.load %arg6[%c0_71, %c0_72] : memref<1x1xf32, #tpu.memory_space<vmem>>, vector<1x1xf32>
    %183 = vector.broadcast %182 : vector<1x1xf32> to vector<2x1xf32>
    %184 = arith.addf %181, %183 : vector<2x1xf32>
    %c0_73 = arith.constant 0 : index
    %c0_74 = arith.constant 0 : index
    %185 = vector.load %arg7[%c0_73, %c0_74] : memref<2x1xf32, #tpu.memory_space<vmem>>, vector<2x1xf32>
    tpu.vector_store %arg7[%c0_73, %c0_74], %184 {strides = array<i32>} : memref<2x1xf32, #tpu.memory_space<vmem>>, vector<2x1xf32>,
    return
  }
  func.func @transform_0(%arg0: i32) -> (i32, i32, i32) {
    %c0_i32 = arith.constant 0 : i32
    %c0_i32_0 = arith.constant 0 : i32
    %c0_i32_1 = arith.constant 0 : i32
    return %arg0, %c0_i32, %c0_i32_0 : i32, i32, i32
  }
  func.func @transform_1(%arg0: i32) -> (i32, i32) {
    %c0_i32 = arith.constant 0 : i32
    %c0_i32_0 = arith.constant 0 : i32
    %c0_i32_1 = arith.constant 0 : i32
    return %c0_i32, %c0_i32_0 : i32, i32
  }
  func.func @transform_2(%arg0: i32) -> (i32, i32) {
    %c0_i32 = arith.constant 0 : i32
    %c0_i32_0 = arith.constant 0 : i32
    %c0_i32_1 = arith.constant 0 : i32
    return %c0_i32, %c0_i32_0 : i32, i32
  }
  func.func @transform_3(%arg0: i32) -> (i32, i32) {
    %c0_i32 = arith.constant 0 : i32
    %c0_i32_0 = arith.constant 0 : i32
    %c0_i32_1 = arith.constant 0 : i32
    return %c0_i32, %c0_i32_0 : i32, i32
  }
  func.func @transform_4(%arg0: i32) -> (i32, i32) {
    %c0_i32 = arith.constant 0 : i32
    %c0_i32_0 = arith.constant 0 : i32
    %c0_i32_1 = arith.constant 0 : i32
    return %c0_i32, %c0_i32_0 : i32, i32
  }
  func.func @transform_5(%arg0: i32) -> (i32, i32) {
    %c0_i32 = arith.constant 0 : i32
    %c0_i32_0 = arith.constant 0 : i32
    %c0_i32_1 = arith.constant 0 : i32
    return %c0_i32, %c0_i32_0 : i32, i32
  }
  func.func @transform_6(%arg0: i32) -> (i32, i32) {
    %c0_i32 = arith.constant 0 : i32
    %c0_i32_0 = arith.constant 0 : i32
    return %arg0, %c0_i32 : i32, i32
  }
}

</mosaic_0001>

<llo_original>
// kernel: lstm_model_forward.1
$region0: #{lstm_model_forward.1}
  #allocation0 [shape = 'u32[]', space=smem, size = 0x4, offset = 0x4, fixed_abs, tag = 'smem constant byte address 0x4 - core index']
  #allocation1 [shape = 'u32[144,128]{1,0:T(1,128)}', space=vmem, size = 0x12000, scoped, tag = 'internal scratch']
  #allocation2 [shape = 'f32[2,8,128]{2,1,0:T(8,128)}', space=vmem, size = 0x2000, scoped, tag = 'scratch operand']
  #allocation3 [shape = 'f32[1,1]{1,0:T(1,128)S(1)}', space=vmem, size = 0x200, scoped, tag = 'scoped memory for lstm_model_forward.1']
  %s0 = inlined_call_operand.vmem [shape: f32[2,8,1], index: 0, kind: input, shape index: {}]
  %s1 = inlined_call_operand.vmem [shape: f32[1,128], index: 1, kind: input, shape index: {}]
  %s2 = inlined_call_operand.vmem [shape: bf16[128,128], index: 2, kind: input, shape index: {}]
  %s3 = inlined_call_operand.vmem [shape: f32[1,128], index: 3, kind: input, shape index: {}]
  %s4 = inlined_call_operand.vmem [shape: f32[128,1], index: 4, kind: input, shape index: {}]
  %s5 = inlined_call_operand.<no memory space> [shape: f32[1,1], index: 5, kind: input, shape index: {}]
  %s6 = inlined_call_operand.vmem [shape: f32[2,1], index: 6, kind: output, shape index: {}]
  %s7 = sld [smem:[#allocation0]]
  $region34: #{lstm_model_forward.1} parent=0
    _
  %s9 = ssub.s32 1, %s7
  %s10 = scalar_select 0, %s9, %s7
  %v11 = vstv %s5
  %12 = vst [vmem:[#allocation3] sm:$0x1] %v11
  // Predicated region
  $region2: #{lstm_model_forward.1} parent=0 // pred_check
    _
  $region3: #{lstm_model_forward.1} parent=0 // pred_check_branch
    %14 = sbr.rel (0) target = $region5
  $region4: #{lstm_model_forward.1} parent=0 // pred_region
    _
  $region5: #{lstm_model_forward.1} parent=0 // pred_fallthru
    _
  // Predicated region
  $region6: #{lstm_model_forward.1} parent=0 // pred_check
    _
  $region7: #{lstm_model_forward.1} parent=0 // pred_check_branch
    %16 = sbr.rel (0) target = $region9
  $region8: #{lstm_model_forward.1} parent=0 // pred_region
    _
  $region9: #{lstm_model_forward.1} parent=0 // pred_fallthru
    _
  // Predicated region
  $region10: #{lstm_model_forward.1} parent=0 // pred_check
    _
  $region11: #{lstm_model_forward.1} parent=0 // pred_check_branch
    %18 = sbr.rel (0) target = $region13
  $region12: #{lstm_model_forward.1} parent=0 // pred_region
    _
  $region13: #{lstm_model_forward.1} parent=0 // pred_fallthru
    _
  // Predicated region
  $region14: #{lstm_model_forward.1} parent=0 // pred_check
    _
  $region15: #{lstm_model_forward.1} parent=0 // pred_check_branch
    %20 = sbr.rel (0) target = $region17
  $region16: #{lstm_model_forward.1} parent=0 // pred_region
    _
  $region17: #{lstm_model_forward.1} parent=0 // pred_fallthru
    _
  // Predicated region
  $region18: #{lstm_model_forward.1} parent=0 // pred_check
    _
  $region19: #{lstm_model_forward.1} parent=0 // pred_check_branch
    %22 = sbr.rel (0) target = $region21
  $region20: #{lstm_model_forward.1} parent=0 // pred_region
    _
  $region21: #{lstm_model_forward.1} parent=0 // pred_fallthru
    _
  // Predicated region
  $region22: #{lstm_model_forward.1} parent=0 // pred_check
    _
  $region23: #{lstm_model_forward.1} parent=0 // pred_check_branch
    %24 = sbr.rel (0) target = $region25
  $region24: #{lstm_model_forward.1} parent=0 // pred_region
    _
  $region25: #{lstm_model_forward.1} parent=0 // pred_fallthru
    _
  %v26 = vld [vmem:[%s0] sm:$0xff]
  %v27 = vld [vmem:[%s0 + $0x8] sm:$0xff]
  %v28 = vld [vmem:[%s1] sm:$0x1]
  %30 = vset.pattern.permute.xlu0 0
  %31 = vperm.xlu0 %30, %v26
  %v32 = vpop.permute.xlu0 %31
  %35 = vset.pattern.permute.xlu0 0
  %36 = vperm.xlu0 %35, %v27
  %v37 = vpop.permute.xlu0 %36
  %v40 = vlaneseq
  %v41 = vshrl.u32 %v40, 7
  %v42 = vsub.s32 0, %v41
  %v43 = vrot.slane %v28, %v42
  %v45 = vmul.f32 %v32, %v43
  %v46 = vmul.f32 %v37, %v43
  %v47 = vld [vmem:[%s3] sm:$0x1]
  %v49 = vlaneseq
  %v50 = vshrl.u32 %v49, 7
  %v51 = vsub.s32 0, %v50
  %v52 = vrot.slane %v47, %v51
  %v54 = vadd.f32 %v45, %v52
  %v55 = vadd.f32 %v46, %v52
  %56 = vst [vmem:[#allocation2] sm:$0xff] %v54
  %57 = vst [vmem:[#allocation2 + $0x8] sm:$0xff] %v55
  %v58 = vld [vmem:[%s2] sm:$0xf]
  %v59 = vld [vmem:[%s2 + $0x4] sm:$0xf]
  %v60 = vld [vmem:[%s2 + $0x8] sm:$0xf]
  %v61 = vld [vmem:[%s2 + $0xc] sm:$0xf]
  %v62 = vld [vmem:[%s2 + $0x10] sm:$0xf]
  %v63 = vld [vmem:[%s2 + $0x14] sm:$0xf]
  %v64 = vld [vmem:[%s2 + $0x18] sm:$0xf]
  %v65 = vld [vmem:[%s2 + $0x1c] sm:$0xf]
  %v66 = vld [vmem:[%s2 + $0x20] sm:$0xf]
  %v67 = vld [vmem:[%s2 + $0x24] sm:$0xf]
  %v68 = vld [vmem:[%s2 + $0x28] sm:$0xf]
  %v69 = vld [vmem:[%s2 + $0x2c] sm:$0xf]
  %v70 = vld [vmem:[%s2 + $0x30] sm:$0xf]
  %v71 = vld [vmem:[%s2 + $0x34] sm:$0xf]
  %v72 = vld [vmem:[%s2 + $0x38] sm:$0xf]
  %v73 = vld [vmem:[%s2 + $0x3c] sm:$0xf]
  %v74 = vlaneseq
  %v75 = vand.u32 %v74, 127
  %vm76 = vcmp.ge.s32.totalorder %v75, 64
  %vm77 = vcmp.lt.s32.totalorder %v75, 96
  %vm78 = vmand %vm76, %vm77
  %v79 = vld [vmem:[#allocation2] sm:$0x1]
  %v80 = vld [vmem:[#allocation2 + $0x8] sm:$0x1]
  %v97 = vunpack.c.l.b16 %v58
  %v98 = vunpack.c.l.b16 %v59
  %v99 = vunpack.c.l.b16 %v60
  %v100 = vunpack.c.l.b16 %v61
  %v101 = vunpack.c.l.b16 %v62
  %v102 = vunpack.c.l.b16 %v63
  %v103 = vunpack.c.l.b16 %v64
  %v104 = vunpack.c.l.b16 %v65
  %v105 = vunpack.c.l.b16 %v66
  %v106 = vunpack.c.l.b16 %v67
  %v107 = vunpack.c.l.b16 %v68
  %v108 = vunpack.c.l.b16 %v69
  %v109 = vunpack.c.l.b16 %v70
  %v110 = vunpack.c.l.b16 %v71
  %v111 = vunpack.c.l.b16 %v72
  %v112 = vunpack.c.l.b16 %v73
  %v113 = vpack.c.b16 %v98, %v97
  %v114 = vpack.c.b16 %v100, %v99
  %v115 = vpack.c.b16 %v102, %v101
  %v116 = vpack.c.b16 %v104, %v103
  %v117 = vpack.c.b16 %v106, %v105
  %v118 = vpack.c.b16 %v108, %v107
  %v119 = vpack.c.b16 %v110, %v109
  %v120 = vpack.c.b16 %v112, %v111
  %129 = vmatprep.subr.bf16.mxu0 0
  %130 = vmatpush1.bf16.msra.mxu0 %v120
  %131 = vmatprep.subr.bf16.mxu0 0
  %132 = vmatpush1.bf16.msra.mxu0 %v119
  %133 = vmatprep.subr.bf16.mxu0 0
  %134 = vmatpush1.bf16.msra.mxu0 %v118
  %135 = vmatprep.subr.bf16.mxu0 0
  %136 = vmatpush1.bf16.msra.mxu0 %v117
  %137 = vmatprep.subr.bf16.mxu0 0
  %138 = vmatpush1.bf16.msra.mxu0 %v116
  %139 = vmatprep.subr.bf16.mxu0 0
  %140 = vmatpush1.bf16.msra.mxu0 %v115
  %141 = vmatprep.subr.bf16.mxu0 0
  %142 = vmatpush1.bf16.msra.mxu0 %v114
  %143 = vmatprep.subr.bf16.mxu0 0
  %144 = vmatpush1.bf16.msra.mxu0 %v113
  %145 = vmatprep.subr.bf16.mxu0 0
  %146 = vmatpush2.bf16.msra.mxu0 0
  %147 = vmatprep.subr.bf16.mxu0 0
  %148 = vmatpush2.bf16.msra.mxu0 0
  %149 = vmatprep.subr.bf16.mxu0 0
  %150 = vmatpush2.bf16.msra.mxu0 0
  %151 = vmatprep.subr.bf16.mxu0 0
  %152 = vmatpush2.bf16.msra.mxu0 0
  %153 = vmatprep.subr.bf16.mxu0 0
  %154 = vmatpush2.bf16.msra.mxu0 0
  %155 = vmatprep.subr.bf16.mxu0 0
  %156 = vmatpush2.bf16.msra.mxu0 0
  %157 = vmatprep.subr.bf16.mxu0 0
  %158 = vmatpush2.bf16.msra.mxu0 0
  %159 = vmatprep.subr.bf16.mxu0 0
  %160 = vmatpush2.bf16.msra.mxu0 0
  %161 = vmatprep.mubr.bf16.mxu0 0
  %162 = vmatmul.mubr.bf16.gmra.mxu0 0
  %v163 = vpop.f32.mrf.mxu0
  %v164 = vadd.f32 0.0, %v163
  %v165 = vpop.f32.mrf.mxu0
  %v166 = vpop.f32.mrf.mxu0
  %v167 = vpop.f32.mrf.mxu0
  %168 = vdwg.mxu0
  %v170 = vrot.slane %v164, 1
  %v173 = vadd.f32 %v79, %v164
  %v174 = vadd.f32 %v80, %v170
  %v175 = vtanh.pop %v173
  %v176 = vtanh.pop %v174
  %v177 = vxor.u32 %v173, 2147483648
  %v178 = vxor.u32 %v174, 2147483648
  %v179 = vmul.f32 %v177, 1.442695
  %v180 = vpow.pop %v179
  %v181 = vmul.f32 %v178, 1.442695
  %v182 = vpow.pop %v181
  %v183 = vadd.f32 %v180, 1.0
  %v184 = vadd.f32 %v182, 1.0
  %v185 = vrcp.pop %v183
  %v186 = vmul.f32 1.0, %v185
  %v187 = vrcp.pop %v184
  %v188 = vmul.f32 1.0, %v187
  %v191 = vrot.slane %v176, 7
  %vm192 = vcmask 1041409
  %v193 = vsel %vm192, %v191, %v175
  %v197 = vrot.slane %v188, 7
  %v198 = vsel %vm192, %v197, %v186
  %v200 = vsel %vm78, %v193, %v198
  %201 = vrot.lane.b32.xlu0 %v200, 96
  %v202 = vpop.permute.xlu0 %201
  %203 = vrot.lane.b32.xlu0 %v200, 64
  %v204 = vpop.permute.xlu0 %203
  %205 = vrot.lane.b32.xlu0 %v200, 32
  %v206 = vpop.permute.xlu0 %205
  %v207 = vmul.f32 %v202, 0.0
  %v208 = vmul.f32 %v200, %v204
  %v209 = vadd.f32 %v207, %v208
  %v210 = vtanh.pop %v209
  %v211 = vmul.f32 %v206, %v210
  %v212 = vld [vmem:[#allocation2 + $0x1] sm:$0x1]
  %v213 = vld [vmem:[#allocation2 + $0x9] sm:$0x1]
  %v214 = vpack.c.bf16 %v211, %v211
  %215 = vmatprep.subr.bf16.mxu0 0
  %216 = vmatpush1.bf16.msra.mxu0 %v120
  %217 = vmatprep.subr.bf16.mxu0 0
  %218 = vmatpush1.bf16.msra.mxu0 %v119
  %219 = vmatprep.subr.bf16.mxu0 0
  %220 = vmatpush1.bf16.msra.mxu0 %v118
  %221 = vmatprep.subr.bf16.mxu0 0
  %222 = vmatpush1.bf16.msra.mxu0 %v117
  %223 = vmatprep.subr.bf16.mxu0 0
  %224 = vmatpush1.bf16.msra.mxu0 %v116
  %225 = vmatprep.subr.bf16.mxu0 0
  %226 = vmatpush1.bf16.msra.mxu0 %v115
  %227 = vmatprep.subr.bf16.mxu0 0
  %228 = vmatpush1.bf16.msra.mxu0 %v114
  %229 = vmatprep.subr.bf16.mxu0 0
  %230 = vmatpush1.bf16.msra.mxu0 %v113
  %231 = vmatprep.subr.bf16.mxu0 0
  %232 = vmatpush2.bf16.msra.mxu0 0
  %233 = vmatprep.subr.bf16.mxu0 0
  %234 = vmatpush2.bf16.msra.mxu0 0
  %235 = vmatprep.subr.bf16.mxu0 0
  %236 = vmatpush2.bf16.msra.mxu0 0
  %237 = vmatprep.subr.bf16.mxu0 0
  %238 = vmatpush2.bf16.msra.mxu0 0
  %239 = vmatprep.subr.bf16.mxu0 0
  %240 = vmatpush2.bf16.msra.mxu0 0
  %241 = vmatprep.subr.bf16.mxu0 0
  %242 = vmatpush2.bf16.msra.mxu0 0
  %243 = vmatprep.subr.bf16.mxu0 0
  %244 = vmatpush2.bf16.msra.mxu0 0
  %245 = vmatprep.subr.bf16.mxu0 0
  %246 = vmatpush2.bf16.msra.mxu0 0
  %247 = vmatprep.mubr.bf16.mxu0 0
  %248 = vmatmul.mubr.bf16.gmra.mxu0 %v214
  %v249 = vpop.f32.mrf.mxu0
  %v250 = vadd.f32 0.0, %v249
  %v251 = vpop.f32.mrf.mxu0
  %v252 = vpop.f32.mrf.mxu0
  %v253 = vpop.f32.mrf.mxu0
  %254 = vdwg.mxu0
  %v256 = vrot.slane %v250, 1
  %v259 = vadd.f32 %v212, %v250
  %v260 = vadd.f32 %v213, %v256
  %v261 = vtanh.pop %v259
  %v262 = vtanh.pop %v260
  %v263 = vxor.u32 %v259, 2147483648
  %v264 = vxor.u32 %v260, 2147483648
  %v265 = vmul.f32 %v263, 1.442695
  %v266 = vpow.pop %v265
  %v267 = vmul.f32 %v264, 1.442695
  %v268 = vpow.pop %v267
  %v269 = vadd.f32 %v266, 1.0
  %v270 = vadd.f32 %v268, 1.0
  %v271 = vrcp.pop %v269
  %v272 = vmul.f32 1.0, %v271
  %v273 = vrcp.pop %v270
  %v274 = vmul.f32 1.0, %v273
  %v277 = vrot.slane %v262, 7
  %v278 = vsel %vm192, %v277, %v261
  %v282 = vrot.slane %v274, 7
  %v283 = vsel %vm192, %v282, %v272
  %v285 = vsel %vm78, %v278, %v283
  %286 = vrot.lane.b32.xlu0 %v285, 96
  %v287 = vpop.permute.xlu0 %286
  %288 = vrot.lane.b32.xlu0 %v285, 64
  %v289 = vpop.permute.xlu0 %288
  %290 = vrot.lane.b32.xlu0 %v285, 32
  %v291 = vpop.permute.xlu0 %290
  %v292 = vmul.f32 %v287, %v209
  %v293 = vmul.f32 %v285, %v289
  %v294 = vadd.f32 %v292, %v293
  %v295 = vtanh.pop %v294
  %v296 = vmul.f32 %v291, %v295
  %v297 = vld [vmem:[#allocation2 + $0x2] sm:$0x1]
  %v298 = vld [vmem:[#allocation2 + $0xa] sm:$0x1]
  %v299 = vpack.c.bf16 %v296, %v296
  %300 = vmatprep.subr.bf16.mxu0 0
  %301 = vmatpush1.bf16.msra.mxu0 %v120
  %302 = vmatprep.subr.bf16.mxu0 0
  %303 = vmatpush1.bf16.msra.mxu0 %v119
  %304 = vmatprep.subr.bf16.mxu0 0
  %305 = vmatpush1.bf16.msra.mxu0 %v118
  %306 = vmatprep.subr.bf16.mxu0 0
  %307 = vmatpush1.bf16.msra.mxu0 %v117
  %308 = vmatprep.subr.bf16.mxu0 0
  %309 = vmatpush1.bf16.msra.mxu0 %v116
  %310 = vmatprep.subr.bf16.mxu0 0
  %311 = vmatpush1.bf16.msra.mxu0 %v115
  %312 = vmatprep.subr.bf16.mxu0 0
  %313 = vmatpush1.bf16.msra.mxu0 %v114
  %314 = vmatprep.subr.bf16.mxu0 0
  %315 = vmatpush1.bf16.msra.mxu0 %v113
  %316 = vmatprep.subr.bf16.mxu0 0
  %317 = vmatpush2.bf16.msra.mxu0 0
  %318 = vmatprep.subr.bf16.mxu0 0
  %319 = vmatpush2.bf16.msra.mxu0 0
  %320 = vmatprep.subr.bf16.mxu0 0
  %321 = vmatpush2.bf16.msra.mxu0 0
  %322 = vmatprep.subr.bf16.mxu0 0
  %323 = vmatpush2.bf16.msra.mxu0 0
  %324 = vmatprep.subr.bf16.mxu0 0
  %325 = vmatpush2.bf16.msra.mxu0 0
  %326 = vmatprep.subr.bf16.mxu0 0
  %327 = vmatpush2.bf16.msra.mxu0 0
  %328 = vmatprep.subr.bf16.mxu0 0
  %329 = vmatpush2.bf16.msra.mxu0 0
  %330 = vmatprep.subr.bf16.mxu0 0
  %331 = vmatpush2.bf16.msra.mxu0 0
  %332 = vmatprep.mubr.bf16.mxu0 0
  %333 = vmatmul.mubr.bf16.gmra.mxu0 %v299
  %v334 = vpop.f32.mrf.mxu0
  %v335 = vadd.f32 0.0, %v334
  %v336 = vpop.f32.mrf.mxu0
  %v337 = vpop.f32.mrf.mxu0
  %v338 = vpop.f32.mrf.mxu0
  %339 = vdwg.mxu0
  %v341 = vrot.slane %v335, 1
  %v344 = vadd.f32 %v297, %v335
  %v345 = vadd.f32 %v298, %v341
  %v346 = vtanh.pop %v344
  %v347 = vtanh.pop %v345
  %v348 = vxor.u32 %v344, 2147483648
  %v349 = vxor.u32 %v345, 2147483648
  %v350 = vmul.f32 %v348, 1.442695
  %v351 = vpow.pop %v350
  %v352 = vmul.f32 %v349, 1.442695
  %v353 = vpow.pop %v352
  %v354 = vadd.f32 %v351, 1.0
  %v355 = vadd.f32 %v353, 1.0
  %v356 = vrcp.pop %v354
  %v357 = vmul.f32 1.0, %v356
  %v358 = vrcp.pop %v355
  %v359 = vmul.f32 1.0, %v358
  %v362 = vrot.slane %v347, 7
  %v363 = vsel %vm192, %v362, %v346
  %v367 = vrot.slane %v359, 7
  %v368 = vsel %vm192, %v367, %v357
  %v370 = vsel %vm78, %v363, %v368
  %371 = vrot.lane.b32.xlu0 %v370, 96
  %v372 = vpop.permute.xlu0 %371
  %373 = vrot.lane.b32.xlu0 %v370, 64
  %v374 = vpop.permute.xlu0 %373
  %375 = vrot.lane.b32.xlu0 %v370, 32
  %v376 = vpop.permute.xlu0 %375
  %v377 = vmul.f32 %v372, %v294
  %v378 = vmul.f32 %v370, %v374
  %v379 = vadd.f32 %v377, %v378
  %v380 = vtanh.pop %v379
  %v381 = vmul.f32 %v376, %v380
  %v382 = vld [vmem:[#allocation2 + $0x3] sm:$0x1]
  %v383 = vld [vmem:[#allocation2 + $0xb] sm:$0x1]
  %v384 = vpack.c.bf16 %v381, %v381
  %385 = vmatprep.subr.bf16.mxu0 0
  %386 = vmatpush1.bf16.msra.mxu0 %v120
  %387 = vmatprep.subr.bf16.mxu0 0
  %388 = vmatpush1.bf16.msra.mxu0 %v119
  %389 = vmatprep.subr.bf16.mxu0 0
  %390 = vmatpush1.bf16.msra.mxu0 %v118
  %391 = vmatprep.subr.bf16.mxu0 0
  %392 = vmatpush1.bf16.msra.mxu0 %v117
  %393 = vmatprep.subr.bf16.mxu0 0
  %394 = vmatpush1.bf16.msra.mxu0 %v116
  %395 = vmatprep.subr.bf16.mxu0 0
  %396 = vmatpush1.bf16.msra.mxu0 %v115
  %397 = vmatprep.subr.bf16.mxu0 0
  %398 = vmatpush1.bf16.msra.mxu0 %v114
  %399 = vmatprep.subr.bf16.mxu0 0
  %400 = vmatpush1.bf16.msra.mxu0 %v113
  %401 = vmatprep.subr.bf16.mxu0 0
  %402 = vmatpush2.bf16.msra.mxu0 0
  %403 = vmatprep.subr.bf16.mxu0 0
  %404 = vmatpush2.bf16.msra.mxu0 0
  %405 = vmatprep.subr.bf16.mxu0 0
  %406 = vmatpush2.bf16.msra.mxu0 0
  %407 = vmatprep.subr.bf16.mxu0 0
  %408 = vmatpush2.bf16.msra.mxu0 0
  %409 = vmatprep.subr.bf16.mxu0 0
  %410 = vmatpush2.bf16.msra.mxu0 0
  %411 = vmatprep.subr.bf16.mxu0 0
  %412 = vmatpush2.bf16.msra.mxu0 0
  %413 = vmatprep.subr.bf16.mxu0 0
  %414 = vmatpush2.bf16.msra.mxu0 0
  %415 = vmatprep.subr.bf16.mxu0 0
  %416 = vmatpush2.bf16.msra.mxu0 0
  %417 = vmatprep.mubr.bf16.mxu0 0
  %418 = vmatmul.mubr.bf16.gmra.mxu0 %v384
  %v419 = vpop.f32.mrf.mxu0
  %v420 = vadd.f32 0.0, %v419
  %v421 = vpop.f32.mrf.mxu0
  %v422 = vpop.f32.mrf.mxu0
  %v423 = vpop.f32.mrf.mxu0
  %424 = vdwg.mxu0
  %v426 = vrot.slane %v420, 1
  %v429 = vadd.f32 %v382, %v420
  %v430 = vadd.f32 %v383, %v426
  %v431 = vtanh.pop %v429
  %v432 = vtanh.pop %v430
  %v433 = vxor.u32 %v429, 2147483648
  %v434 = vxor.u32 %v430, 2147483648
  %v435 = vmul.f32 %v433, 1.442695
  %v436 = vpow.pop %v435
  %v437 = vmul.f32 %v434, 1.442695
  %v438 = vpow.pop %v437
  %v439 = vadd.f32 %v436, 1.0
  %v440 = vadd.f32 %v438, 1.0
  %v441 = vrcp.pop %v439
  %v442 = vmul.f32 1.0, %v441
  %v443 = vrcp.pop %v440
  %v444 = vmul.f32 1.0, %v443
  %v447 = vrot.slane %v432, 7
  %v448 = vsel %vm192, %v447, %v431
  %v452 = vrot.slane %v444, 7
  %v453 = vsel %vm192, %v452, %v442
  %v455 = vsel %vm78, %v448, %v453
  %456 = vrot.lane.b32.xlu0 %v455, 96
  %v457 = vpop.permute.xlu0 %456
  %458 = vrot.lane.b32.xlu0 %v455, 64
  %v459 = vpop.permute.xlu0 %458
  %460 = vrot.lane.b32.xlu0 %v455, 32
  %v461 = vpop.permute.xlu0 %460
  %v462 = vmul.f32 %v457, %v379
  %v463 = vmul.f32 %v455, %v459
  %v464 = vadd.f32 %v462, %v463
  %v465 = vtanh.pop %v464
  %v466 = vmul.f32 %v461, %v465
  %v467 = vld [vmem:[#allocation2 + $0x4] sm:$0x1]
  %v468 = vld [vmem:[#allocation2 + $0xc] sm:$0x1]
  %v469 = vpack.c.bf16 %v466, %v466
  %470 = vmatprep.subr.bf16.mxu0 0
  %471 = vmatpush1.bf16.msra.mxu0 %v120
  %472 = vmatprep.subr.bf16.mxu0 0
  %473 = vmatpush1.bf16.msra.mxu0 %v119
  %474 = vmatprep.subr.bf16.mxu0 0
  %475 = vmatpush1.bf16.msra.mxu0 %v118
  %476 = vmatprep.subr.bf16.mxu0 0
  %477 = vmatpush1.bf16.msra.mxu0 %v117
  %478 = vmatprep.subr.bf16.mxu0 0
  %479 = vmatpush1.bf16.msra.mxu0 %v116
  %480 = vmatprep.subr.bf16.mxu0 0
  %481 = vmatpush1.bf16.msra.mxu0 %v115
  %482 = vmatprep.subr.bf16.mxu0 0
  %483 = vmatpush1.bf16.msra.mxu0 %v114
  %484 = vmatprep.subr.bf16.mxu0 0
  %485 = vmatpush1.bf16.msra.mxu0 %v113
  %486 = vmatprep.subr.bf16.mxu0 0
  %487 = vmatpush2.bf16.msra.mxu0 0
  %488 = vmatprep.subr.bf16.mxu0 0
  %489 = vmatpush2.bf16.msra.mxu0 0
  %490 = vmatprep.subr.bf16.mxu0 0
  %491 = vmatpush2.bf16.msra.mxu0 0
  %492 = vmatprep.subr.bf16.mxu0 0
  %493 = vmatpush2.bf16.msra.mxu0 0
  %494 = vmatprep.subr.bf16.mxu0 0
  %495 = vmatpush2.bf16.msra.mxu0 0
  %496 = vmatprep.subr.bf16.mxu0 0
  %497 = vmatpush2.bf16.msra.mxu0 0
  %498 = vmatprep.subr.bf16.mxu0 0
  %499 = vmatpush2.bf16.msra.mxu0 0
  %500 = vmatprep.subr.bf16.mxu0 0
  %501 = vmatpush2.bf16.msra.mxu0 0
  %502 = vmatprep.mubr.bf16.mxu0 0
  %503 = vmatmul.mubr.bf16.gmra.mxu0 %v469
  %v504 = vpop.f32.mrf.mxu0
  %v505 = vadd.f32 0.0, %v504
  %v506 = vpop.f32.mrf.mxu0
  %v507 = vpop.f32.mrf.mxu0
  %v508 = vpop.f32.mrf.mxu0
  %509 = vdwg.mxu0
  %v511 = vrot.slane %v505, 1
  %v514 = vadd.f32 %v467, %v505
  %v515 = vadd.f32 %v468, %v511
  %v516 = vtanh.pop %v514
  %v517 = vtanh.pop %v515
  %v518 = vxor.u32 %v514, 2147483648
  %v519 = vxor.u32 %v515, 2147483648
  %v520 = vmul.f32 %v518, 1.442695
  %v521 = vpow.pop %v520
  %v522 = vmul.f32 %v519, 1.442695
  %v523 = vpow.pop %v522
  %v524 = vadd.f32 %v521, 1.0
  %v525 = vadd.f32 %v523, 1.0
  %v526 = vrcp.pop %v524
  %v527 = vmul.f32 1.0, %v526
  %v528 = vrcp.pop %v525
  %v529 = vmul.f32 1.0, %v528
  %v532 = vrot.slane %v517, 7
  %v533 = vsel %vm192, %v532, %v516
  %v537 = vrot.slane %v529, 7
  %v538 = vsel %vm192, %v537, %v527
  %v540 = vsel %vm78, %v533, %v538
  %541 = vrot.lane.b32.xlu0 %v540, 96
  %v542 = vpop.permute.xlu0 %541
  %543 = vrot.lane.b32.xlu0 %v540, 64
  %v544 = vpop.permute.xlu0 %543
  %545 = vrot.lane.b32.xlu0 %v540, 32
  %v546 = vpop.permute.xlu0 %545
  %v547 = vmul.f32 %v542, %v464
  %v548 = vmul.f32 %v540, %v544
  %v549 = vadd.f32 %v547, %v548
  %v550 = vtanh.pop %v549
  %v551 = vmul.f32 %v546, %v550
  %v552 = vld [vmem:[#allocation2 + $0x5] sm:$0x1]
  %v553 = vld [vmem:[#allocation2 + $0xd] sm:$0x1]
  %v554 = vpack.c.bf16 %v551, %v551
  %555 = vmatprep.subr.bf16.mxu0 0
  %556 = vmatpush1.bf16.msra.mxu0 %v120
  %557 = vmatprep.subr.bf16.mxu0 0
  %558 = vmatpush1.bf16.msra.mxu0 %v119
  %559 = vmatprep.subr.bf16.mxu0 0
  %560 = vmatpush1.bf16.msra.mxu0 %v118
  %561 = vmatprep.subr.bf16.mxu0 0
  %562 = vmatpush1.bf16.msra.mxu0 %v117
  %563 = vmatprep.subr.bf16.mxu0 0
  %564 = vmatpush1.bf16.msra.mxu0 %v116
  %565 = vmatprep.subr.bf16.mxu0 0
  %566 = vmatpush1.bf16.msra.mxu0 %v115
  %567 = vmatprep.subr.bf16.mxu0 0
  %568 = vmatpush1.bf16.msra.mxu0 %v114
  %569 = vmatprep.subr.bf16.mxu0 0
  %570 = vmatpush1.bf16.msra.mxu0 %v113
  %571 = vmatprep.subr.bf16.mxu0 0
  %572 = vmatpush2.bf16.msra.mxu0 0
  %573 = vmatprep.subr.bf16.mxu0 0
  %574 = vmatpush2.bf16.msra.mxu0 0
  %575 = vmatprep.subr.bf16.mxu0 0
  %576 = vmatpush2.bf16.msra.mxu0 0
  %577 = vmatprep.subr.bf16.mxu0 0
  %578 = vmatpush2.bf16.msra.mxu0 0
  %579 = vmatprep.subr.bf16.mxu0 0
  %580 = vmatpush2.bf16.msra.mxu0 0
  %581 = vmatprep.subr.bf16.mxu0 0
  %582 = vmatpush2.bf16.msra.mxu0 0
  %583 = vmatprep.subr.bf16.mxu0 0
  %584 = vmatpush2.bf16.msra.mxu0 0
  %585 = vmatprep.subr.bf16.mxu0 0
  %586 = vmatpush2.bf16.msra.mxu0 0
  %587 = vmatprep.mubr.bf16.mxu0 0
  %588 = vmatmul.mubr.bf16.gmra.mxu0 %v554
  %v589 = vpop.f32.mrf.mxu0
  %v590 = vadd.f32 0.0, %v589
  %v591 = vpop.f32.mrf.mxu0
  %v592 = vpop.f32.mrf.mxu0
  %v593 = vpop.f32.mrf.mxu0
  %594 = vdwg.mxu0
  %v596 = vrot.slane %v590, 1
  %v599 = vadd.f32 %v552, %v590
  %v600 = vadd.f32 %v553, %v596
  %v601 = vtanh.pop %v599
  %v602 = vtanh.pop %v600
  %v603 = vxor.u32 %v599, 2147483648
  %v604 = vxor.u32 %v600, 2147483648
  %v605 = vmul.f32 %v603, 1.442695
  %v606 = vpow.pop %v605
  %v607 = vmul.f32 %v604, 1.442695
  %v608 = vpow.pop %v607
  %v609 = vadd.f32 %v606, 1.0
  %v610 = vadd.f32 %v608, 1.0
  %v611 = vrcp.pop %v609
  %v612 = vmul.f32 1.0, %v611
  %v613 = vrcp.pop %v610
  %v614 = vmul.f32 1.0, %v613
  %v617 = vrot.slane %v602, 7
  %v618 = vsel %vm192, %v617, %v601
  %v622 = vrot.slane %v614, 7
  %v623 = vsel %vm192, %v622, %v612
  %v625 = vsel %vm78, %v618, %v623
  %626 = vrot.lane.b32.xlu0 %v625, 96
  %v627 = vpop.permute.xlu0 %626
  %628 = vrot.lane.b32.xlu0 %v625, 64
  %v629 = vpop.permute.xlu0 %628
  %630 = vrot.lane.b32.xlu0 %v625, 32
  %v631 = vpop.permute.xlu0 %630
  %v632 = vmul.f32 %v627, %v549
  %v633 = vmul.f32 %v625, %v629
  %v634 = vadd.f32 %v632, %v633
  %v635 = vtanh.pop %v634
  %v636 = vmul.f32 %v631, %v635
  %v637 = vld [vmem:[#allocation2 + $0x6] sm:$0x1]
  %v638 = vld [vmem:[#allocation2 + $0xe] sm:$0x1]
  %v639 = vpack.c.bf16 %v636, %v636
  %640 = vmatprep.subr.bf16.mxu0 0
  %641 = vmatpush1.bf16.msra.mxu0 %v120
  %642 = vmatprep.subr.bf16.mxu0 0
  %643 = vmatpush1.bf16.msra.mxu0 %v119
  %644 = vmatprep.subr.bf16.mxu0 0
  %645 = vmatpush1.bf16.msra.mxu0 %v118
  %646 = vmatprep.subr.bf16.mxu0 0
  %647 = vmatpush1.bf16.msra.mxu0 %v117
  %648 = vmatprep.subr.bf16.mxu0 0
  %649 = vmatpush1.bf16.msra.mxu0 %v116
  %650 = vmatprep.subr.bf16.mxu0 0
  %651 = vmatpush1.bf16.msra.mxu0 %v115
  %652 = vmatprep.subr.bf16.mxu0 0
  %653 = vmatpush1.bf16.msra.mxu0 %v114
  %654 = vmatprep.subr.bf16.mxu0 0
  %655 = vmatpush1.bf16.msra.mxu0 %v113
  %656 = vmatprep.subr.bf16.mxu0 0
  %657 = vmatpush2.bf16.msra.mxu0 0
  %658 = vmatprep.subr.bf16.mxu0 0
  %659 = vmatpush2.bf16.msra.mxu0 0
  %660 = vmatprep.subr.bf16.mxu0 0
  %661 = vmatpush2.bf16.msra.mxu0 0
  %662 = vmatprep.subr.bf16.mxu0 0
  %663 = vmatpush2.bf16.msra.mxu0 0
  %664 = vmatprep.subr.bf16.mxu0 0
  %665 = vmatpush2.bf16.msra.mxu0 0
  %666 = vmatprep.subr.bf16.mxu0 0
  %667 = vmatpush2.bf16.msra.mxu0 0
  %668 = vmatprep.subr.bf16.mxu0 0
  %669 = vmatpush2.bf16.msra.mxu0 0
  %670 = vmatprep.subr.bf16.mxu0 0
  %671 = vmatpush2.bf16.msra.mxu0 0
  %672 = vmatprep.mubr.bf16.mxu0 0
  %673 = vmatmul.mubr.bf16.gmra.mxu0 %v639
  %v674 = vpop.f32.mrf.mxu0
  %v675 = vadd.f32 0.0, %v674
  %v676 = vpop.f32.mrf.mxu0
  %v677 = vpop.f32.mrf.mxu0
  %v678 = vpop.f32.mrf.mxu0
  %679 = vdwg.mxu0
  %v681 = vrot.slane %v675, 1
  %v684 = vadd.f32 %v637, %v675
  %v685 = vadd.f32 %v638, %v681
  %v686 = vtanh.pop %v684
  %v687 = vtanh.pop %v685
  %v688 = vxor.u32 %v684, 2147483648
  %v689 = vxor.u32 %v685, 2147483648
  %v690 = vmul.f32 %v688, 1.442695
  %v691 = vpow.pop %v690
  %v692 = vmul.f32 %v689, 1.442695
  %v693 = vpow.pop %v692
  %v694 = vadd.f32 %v691, 1.0
  %v695 = vadd.f32 %v693, 1.0
  %v696 = vrcp.pop %v694
  %v697 = vmul.f32 1.0, %v696
  %v698 = vrcp.pop %v695
  %v699 = vmul.f32 1.0, %v698
  %v702 = vrot.slane %v687, 7
  %v703 = vsel %vm192, %v702, %v686
  %v707 = vrot.slane %v699, 7
  %v708 = vsel %vm192, %v707, %v697
  %v710 = vsel %vm78, %v703, %v708
  %711 = vrot.lane.b32.xlu0 %v710, 96
  %v712 = vpop.permute.xlu0 %711
  %713 = vrot.lane.b32.xlu0 %v710, 64
  %v714 = vpop.permute.xlu0 %713
  %715 = vrot.lane.b32.xlu0 %v710, 32
  %v716 = vpop.permute.xlu0 %715
  %v717 = vmul.f32 %v712, %v634
  %v718 = vmul.f32 %v710, %v714
  %v719 = vadd.f32 %v717, %v718
  %v720 = vtanh.pop %v719
  %v721 = vmul.f32 %v716, %v720
  %v722 = vld [vmem:[#allocation2 + $0x7] sm:$0x1]
  %v723 = vld [vmem:[#allocation2 + $0xf] sm:$0x1]
  %v724 = vpack.c.bf16 %v721, %v721
  %725 = vmatprep.subr.bf16.mxu0 0
  %726 = vmatpush1.bf16.msra.mxu0 %v120
  %727 = vmatprep.subr.bf16.mxu0 0
  %728 = vmatpush1.bf16.msra.mxu0 %v119
  %729 = vmatprep.subr.bf16.mxu0 0
  %730 = vmatpush1.bf16.msra.mxu0 %v118
  %731 = vmatprep.subr.bf16.mxu0 0
  %732 = vmatpush1.bf16.msra.mxu0 %v117
  %733 = vmatprep.subr.bf16.mxu0 0
  %734 = vmatpush1.bf16.msra.mxu0 %v116
  %735 = vmatprep.subr.bf16.mxu0 0
  %736 = vmatpush1.bf16.msra.mxu0 %v115
  %737 = vmatprep.subr.bf16.mxu0 0
  %738 = vmatpush1.bf16.msra.mxu0 %v114
  %739 = vmatprep.subr.bf16.mxu0 0
  %740 = vmatpush1.bf16.msra.mxu0 %v113
  %741 = vmatprep.subr.bf16.mxu0 0
  %742 = vmatpush2.bf16.msra.mxu0 0
  %743 = vmatprep.subr.bf16.mxu0 0
  %744 = vmatpush2.bf16.msra.mxu0 0
  %745 = vmatprep.subr.bf16.mxu0 0
  %746 = vmatpush2.bf16.msra.mxu0 0
  %747 = vmatprep.subr.bf16.mxu0 0
  %748 = vmatpush2.bf16.msra.mxu0 0
  %749 = vmatprep.subr.bf16.mxu0 0
  %750 = vmatpush2.bf16.msra.mxu0 0
  %751 = vmatprep.subr.bf16.mxu0 0
  %752 = vmatpush2.bf16.msra.mxu0 0
  %753 = vmatprep.subr.bf16.mxu0 0
  %754 = vmatpush2.bf16.msra.mxu0 0
  %755 = vmatprep.subr.bf16.mxu0 0
  %756 = vmatpush2.bf16.msra.mxu0 0
  %757 = vmatprep.mubr.bf16.mxu0 0
  %758 = vmatmul.mubr.bf16.gmra.mxu0 %v724
  %v759 = vpop.f32.mrf.mxu0
  %v760 = vadd.f32 0.0, %v759
  %v761 = vpop.f32.mrf.mxu0
  %v762 = vpop.f32.mrf.mxu0
  %v763 = vpop.f32.mrf.mxu0
  %764 = vdwg.mxu0
  %v766 = vrot.slane %v760, 1
  %v769 = vadd.f32 %v722, %v760
  %v770 = vadd.f32 %v723, %v766
  %v771 = vtanh.pop %v769
  %v772 = vtanh.pop %v770
  %v773 = vxor.u32 %v769, 2147483648
  %v774 = vxor.u32 %v770, 2147483648
  %v775 = vmul.f32 %v773, 1.442695
  %v776 = vpow.pop %v775
  %v777 = vmul.f32 %v774, 1.442695
  %v778 = vpow.pop %v777
  %v779 = vadd.f32 %v776, 1.0
  %v780 = vadd.f32 %v778, 1.0
  %v781 = vrcp.pop %v779
  %v782 = vmul.f32 1.0, %v781
  %v783 = vrcp.pop %v780
  %v784 = vmul.f32 1.0, %v783
  %v787 = vrot.slane %v772, 7
  %v788 = vsel %vm192, %v787, %v771
  %v792 = vrot.slane %v784, 7
  %v793 = vsel %vm192, %v792, %v782
  %v795 = vsel %vm78, %v788, %v793
  %796 = vrot.lane.b32.xlu0 %v795, 96
  %v797 = vpop.permute.xlu0 %796
  %798 = vrot.lane.b32.xlu0 %v795, 64
  %v799 = vpop.permute.xlu0 %798
  %800 = vrot.lane.b32.xlu0 %v795, 32
  %v801 = vpop.permute.xlu0 %800
  %v802 = vmul.f32 %v797, %v719
  %v803 = vmul.f32 %v795, %v799
  %v804 = vadd.f32 %v802, %v803
  %v805 = vtanh.pop %v804
  %v806 = vmul.f32 %v801, %v805
  %v807 = vld [vmem:[%s4] sm:$0xff]
  %v808 = vld [vmem:[%s4 + $0x8] sm:$0xff]
  %v809 = vld [vmem:[%s4 + $0x10] sm:$0xff]
  %v810 = vld [vmem:[%s4 + $0x18] sm:$0xff]
  %v811 = vld [vmem:[%s4 + $0x20] sm:$0xff]
  %v812 = vld [vmem:[%s4 + $0x28] sm:$0xff]
  %v813 = vld [vmem:[%s4 + $0x30] sm:$0xff]
  %v814 = vld [vmem:[%s4 + $0x38] sm:$0xff]
  %v815 = vld [vmem:[%s4 + $0x40] sm:$0xff]
  %v816 = vld [vmem:[%s4 + $0x48] sm:$0xff]
  %v817 = vld [vmem:[%s4 + $0x50] sm:$0xff]
  %v818 = vld [vmem:[%s4 + $0x58] sm:$0xff]
  %v819 = vld [vmem:[%s4 + $0x60] sm:$0xff]
  %v820 = vld [vmem:[%s4 + $0x68] sm:$0xff]
  %v821 = vld [vmem:[%s4 + $0x70] sm:$0xff]
  %v822 = vld [vmem:[%s4 + $0x78] sm:$0xff]
  %v823 = vld [vmem:[#allocation3] sm:$0x1]
  %v825 = vlaneseq
  %v826 = vshrl.u32 %v825, 7
  %v827 = vsub.s32 0, %v826
  %v828 = vrot.slane %v823, %v827
  %830 = vmatprep.subr.mxu0 0.0
  %831 = vmatpush1.msra.mxu0 %v822
  %832 = vmatprep.subr.mxu0 0.0
  %833 = vmatpush1.msra.mxu0 %v821
  %834 = vmatprep.subr.mxu0 0.0
  %835 = vmatpush1.msra.mxu0 %v820
  %836 = vmatprep.subr.mxu0 0.0
  %837 = vmatpush1.msra.mxu0 %v819
  %838 = vmatprep.subr.mxu0 0.0
  %839 = vmatpush1.msra.mxu0 %v818
  %840 = vmatprep.subr.mxu0 0.0
  %841 = vmatpush1.msra.mxu0 %v817
  %842 = vmatprep.subr.mxu0 0.0
  %843 = vmatpush1.msra.mxu0 %v816
  %844 = vmatprep.subr.mxu0 0.0
  %845 = vmatpush1.msra.mxu0 %v815
  %846 = vmatprep.subr.mxu0 0.0
  %847 = vmatpush1.msra.mxu0 %v814
  %848 = vmatprep.subr.mxu0 0.0
  %849 = vmatpush1.msra.mxu0 %v813
  %850 = vmatprep.subr.mxu0 0.0
  %851 = vmatpush1.msra.mxu0 %v812
  %852 = vmatprep.subr.mxu0 0.0
  %853 = vmatpush1.msra.mxu0 %v811
  %854 = vmatprep.subr.mxu0 0.0
  %855 = vmatpush1.msra.mxu0 %v810
  %856 = vmatprep.subr.mxu0 0.0
  %857 = vmatpush1.msra.mxu0 %v809
  %858 = vmatprep.subr.mxu0 0.0
  %859 = vmatpush1.msra.mxu0 %v808
  %860 = vmatprep.subr.mxu0 0.0
  %861 = vmatpush1.msra.mxu0 %v807
  %862 = vmatprep.subr.mxu0 0.0
  %863 = vmatpush2.msra.mxu0 0.0
  %864 = vmatprep.subr.mxu0 0.0
  %865 = vmatpush2.msra.mxu0 0.0
  %866 = vmatprep.subr.mxu0 0.0
  %867 = vmatpush2.msra.mxu0 0.0
  %868 = vmatprep.subr.mxu0 0.0
  %869 = vmatpush2.msra.mxu0 0.0
  %870 = vmatprep.subr.mxu0 0.0
  %871 = vmatpush2.msra.mxu0 0.0
  %872 = vmatprep.subr.mxu0 0.0
  %873 = vmatpush2.msra.mxu0 0.0
  %874 = vmatprep.subr.mxu0 0.0
  %875 = vmatpush2.msra.mxu0 0.0
  %876 = vmatprep.subr.mxu0 0.0
  %877 = vmatpush2.msra.mxu0 0.0
  %878 = vmatprep.subr.mxu0 0.0
  %879 = vmatpush2.msra.mxu0 0.0
  %880 = vmatprep.subr.mxu0 0.0
  %881 = vmatpush2.msra.mxu0 0.0
  %882 = vmatprep.subr.mxu0 0.0
  %883 = vmatpush2.msra.mxu0 0.0
  %884 = vmatprep.subr.mxu0 0.0
  %885 = vmatpush2.msra.mxu0 0.0
  %886 = vmatprep.subr.mxu0 0.0
  %887 = vmatpush2.msra.mxu0 0.0
  %888 = vmatprep.subr.mxu0 0.0
  %889 = vmatpush2.msra.mxu0 0.0
  %890 = vmatprep.subr.mxu0 0.0
  %891 = vmatpush2.msra.mxu0 0.0
  %892 = vmatprep.subr.mxu0 0.0
  %893 = vmatpush2.msra.mxu0 0.0
  %894 = vmatprep.mubr.f32.mxu0 0.0
  %895 = vmatmul.mubr.f32.gmra.mxu0 %v806
  %v896 = vpop.f32.mrf.mxu0
  %v897 = vadd.f32 %v828, %v896
  %v898 = vpop.f32.mrf.mxu0
  %899 = vdwg.mxu0
  %vm900 = vcmask 1024
  %901 = vst.msk [vmem:[%s6] sm:$0x3] %vm900, %v897
  // Predicated region
  $region26: #{lstm_model_forward.1} parent=0 // pred_check
    _
  $region27: #{lstm_model_forward.1} parent=0 // pred_check_branch
    %903 = sbr.rel (0) target = $region29
  $region28: #{lstm_model_forward.1} parent=0 // pred_region
    _
  $region29: #{lstm_model_forward.1} parent=0 // pred_fallthru
    _
  // Predicated region
  $region30: #{lstm_model_forward.1} parent=0 // pred_check
    _
  $region31: #{lstm_model_forward.1} parent=0 // pred_check_branch
    %905 = sbr.rel (0) target = $region33
  $region32: #{lstm_model_forward.1} parent=0 // pred_region
    _
  $region33: #{lstm_model_forward.1} parent=0 // pred_fallthru
    _

</llo_original>
